<compile_context>
chip_gen: v7x
topology: tpu7x:2x2x1
jax: 0.10.0
libtpu: 0.0.40
codegen_flags: <defaults>
</compile_context>

<pallas_src>
import functools

import jax
import jax.numpy as jnp
from jax.experimental import pallas as pl
from jax.experimental.pallas import tpu as pltpu

LANE = 128
_MiB = 1024 * 1024


def _round_up(n: int, m: int) -> int:
    return ((n + m - 1) // m) * m


def _pad2d(x, rows: int, cols: int):
    r, c = x.shape
    if r == rows and c == cols:
        return x
    return jnp.pad(x, ((0, rows - r), (0, cols - c)))


def _vmem_limit_bytes() -> int:
    """Per-generation scoped-VMEM request: ~48 MiB on v7x, ~96 MiB on v5e/v6e."""
    try:
        cap = int(pltpu.get_tpu_info().vmem_capacity_bytes)
    except Exception:
        cap = 64 * _MiB  # conservative guess, safe on every generation
    return min(cap * 3 // 4, 100 * _MiB)


def _pick_batch_tile(batch: int):
    """Batch tiling: multiple of 16 (bf16 packing); >=2 grid steps when possible
    so both v7x TensorCores get work; 256-row tiles at large batch."""
    m16 = _round_up(batch, 16)
    if m16 < 32:
        tm = m16
    elif m16 <= 512:
        tm = _round_up((m16 + 1) // 2, 16)
    else:
        tm = 256  # matches 2x256 MXU on v6e/v7x; sweep {128,256,512} on v5e
    m_pad = _round_up(batch, tm)
    return tm, m_pad


def _mlp_group_kernel(*refs, n_layers: int, relu_last: bool):
    """refs = (x_ref, w0_ref, b0_ref, w1_ref, b1_ref, ..., o_ref).

    x_ref: f32 (or bf16 from a previous group) - cast to bf16 in-kernel.
    w_i: bf16 (MXU operand), b_i: f32.  Statically unrolled over layers;
    intermediate activations live only in VMEM / vregs.
    """
    x_ref = refs[0]
    o_ref = refs[-1]

    h = x_ref[...].astype(jnp.bfloat16)  # VPU cast, hidden under the MXU
    for i in range(n_layers):
        w_ref = refs[1 + 2 * i]
        b_ref = refs[2 + 2 * i]
        acc = jnp.dot(h, w_ref[...], preferred_element_type=jnp.float32)
        acc = acc + b_ref[...]                       # f32 bias add
        last = i == n_layers - 1
        if (not last) or relu_last:
            acc = jnp.maximum(acc, 0.0)              # ReLU in f32
        if last:
            o_ref[...] = acc.astype(o_ref.dtype)
        else:
            h = acc.astype(jnp.bfloat16)             # next-layer MXU operand


def _run_group(x_p, group_params, *, relu_last, out_dtype, tm, vmem_limit,
               single_buffer_weights):
    """One fused pallas_call over a contiguous group of layers."""
    m_pad, k0 = x_p.shape
    grid = (m_pad // tm,)

    # Weights/biases have a constant (0, 0) index map -> single-buffer them so
    # whole-network residency does not pay 2x VMEM (v7x has only 64 MiB).
    w_kwargs = dict(pipeline_mode=pl.Buffered(1)) if single_buffer_weights else {}

    in_specs = [pl.BlockSpec((tm, k0), lambda gi: (gi, 0))]
    flat_params = []
    flops = 0
    bytes_accessed = int(x_p.size) * x_p.dtype.itemsize
    for (w, b) in group_params:
        kp, np_ = w.shape
        in_specs.append(pl.BlockSpec((kp, np_), lambda gi: (0, 0), **w_kwargs))
        in_specs.append(pl.BlockSpec((1, np_), lambda gi: (0, 0), **w_kwargs))
        flat_params += [w, b]
        flops += 2 * m_pad * kp * np_
        bytes_accessed += int(w.size) * 2 + int(b.size) * 4
    n_out = group_params[-1][0].shape[1]
    bytes_accessed += m_pad * n_out * jnp.dtype(out_dtype).itemsize

    kernel = functools.partial(
        _mlp_group_kernel, n_layers=len(group_params), relu_last=relu_last)

    return pl.pallas_call(
        kernel,
        out_shape=jax.ShapeDtypeStruct((m_pad, n_out), out_dtype),
        grid=grid,
        in_specs=in_specs,
        out_specs=pl.BlockSpec((tm, n_out), lambda gi: (gi, 0)),
        compiler_params=pltpu.CompilerParams(
            dimension_semantics=("parallel",),
            vmem_limit_bytes=vmem_limit,
        ),
        cost_estimate=pl.CostEstimate(
            flops=flops, transcendentals=0, bytes_accessed=bytes_accessed),
    )(x_p, *flat_params)


def prepare_mlp_params(params, n_inputs):
    """One-time (outside the per-call path) pad-to-128 + cast of all weights.

    Returns list of (W_bf16 padded [K_pad, N_pad], b_f32 padded [1, N_pad]).
    Zero padding is exact: padded K rows / N lanes contribute nothing.
    """
    dims = [int(n_inputs)] + [int(w.shape[1]) for (w, _) in params]
    dims_pad = [_round_up(d, LANE) for d in dims]
    prepared = []
    for i, (w, b) in enumerate(params):
        wp = _pad2d(w, dims_pad[i], dims_pad[i + 1]).astype(jnp.bfloat16)
        bp = _pad2d(b.reshape(1, -1), 1, dims_pad[i + 1]).astype(jnp.float32)
        prepared.append((wp, bp))
    return prepared


def mlp_forward_pallas(x, prepared_params, *, n_classes, out_dtype=jnp.float32,
                       single_buffer_weights=True):
    """Forward pass of the MLP. `prepared_params` come from prepare_mlp_params."""
    batch, n_in = x.shape
    k0_pad = prepared_params[0][0].shape[0]
    assert n_in <= k0_pad

    tm, m_pad = _pick_batch_tile(batch)
    vmem_limit = _vmem_limit_bytes()

    # Zero-pad x in f32 only (no wrapper cast); bf16 cast happens in-kernel.
    x_p = _pad2d(x, m_pad, k0_pad)

    # Greedily group layers so each group's resident weights fit the VMEM budget
    # (large-config / v7x fallback: stream layer groups instead of VMEM-OOM).
    weight_budget = max(vmem_limit * 2 // 5, 4 * _MiB)
    groups, cur, cur_bytes = [], [], 0
    for (w, b) in prepared_params:
        nbytes = int(w.size) * 2 + int(b.size) * 4
        if cur and cur_bytes + nbytes > weight_budget:
            groups.append(cur)
            cur, cur_bytes = [], 0
        cur.append((w, b))
        cur_bytes += nbytes
    groups.append(cur)

    h = x_p
    for gi, group in enumerate(groups):
        last_group = gi == len(groups) - 1
        h = _run_group(
            h, group,
            relu_last=not last_group,  # ReLU after every layer except the final one
            out_dtype=out_dtype if last_group else jnp.bfloat16,
            tm=tm, vmem_limit=vmem_limit,
            single_buffer_weights=single_buffer_weights)

    return h[:batch, :n_classes]


def init_mlp_params(key, n_inputs, n_hidden, n_classes, dtype=jnp.float32):
    """Kaiming-style init matching nn.Linear semantics.

    Returns a list of (W, b) with W: (fan_in, fan_out), b: (1, fan_out),
    so the forward computes x @ W + b (== nn.Linear's x @ W.T + b).
    """
    dims = [n_inputs] + list(n_hidden) + [n_classes]
    params = []
    for i in range(len(dims) - 1):
        fan_in, fan_out = dims[i], dims[i + 1]
        key, wk, bk = jax.random.split(key, 3)
        w = jax.random.normal(wk, (fan_in, fan_out), dtype) * jnp.sqrt(2.0 / fan_in)
        bound = 1.0 / jnp.sqrt(float(fan_in))
        b = jax.random.uniform(bk, (1, fan_out), dtype, -bound, bound)
        params.append((w, b))
    return params


def mlp_forward_reference(x, params):
    """Pure-JAX reference with the same bf16-MXU / f32-accumulate policy."""
    out = x.astype(jnp.bfloat16)
    n_layers = len(params)
    for i, (w, b) in enumerate(params):
        out = jnp.dot(out, w.astype(jnp.bfloat16),
                      preferred_element_type=jnp.float32) + b
        if i != n_layers - 1:
            out = jnp.maximum(out, 0.0).astype(jnp.bfloat16)
    return out


if __name__ == "__main__":
    key = jax.random.PRNGKey(0)
    kx, kp = jax.random.split(key)

    batch = 8
    n_inputs = 32
    n_hidden = [64, 32]
    n_classes = 10

    x = jax.random.normal(kx, (batch, n_inputs), jnp.float32)
    params = init_mlp_params(kp, n_inputs, n_hidden, n_classes)

    # One-time pad/cast of weights, kept out of the per-call path.
    prepared = prepare_mlp_params(params, n_inputs)

    fwd = jax.jit(
        mlp_forward_pallas,
        static_argnames=("n_classes", "out_dtype", "single_buffer_weights"))

    try:
        out = jax.block_until_ready(fwd(x, prepared, n_classes=n_classes))
    except Exception:
        # pipeline_mode=pl.Buffered(1) (single-buffered weight specs) support can
        # vary across JAX versions; fall back to default double-buffered specs.
        out = jax.block_until_ready(
            fwd(x, prepared, n_classes=n_classes, single_buffer_weights=False))

    ref = mlp_forward_reference(x, params)
    assert out.shape == (batch, n_classes)
    assert jnp.allclose(out, ref, atol=2e-2, rtol=2e-2), "mismatch vs reference"

    print("KERNEL_OK")
</pallas_src>

<mosaic_0001>
module attributes {stable_mosaic.version = 11 : i64} {
  func.func @_mlp_group_kernel(%arg0: i32, %arg1: memref<16x128xf32, #tpu.memory_space<vmem>>, %arg2: memref<128x128xbf16, #tpu.memory_space<vmem>>, %arg3: memref<1x128xf32, #tpu.memory_space<vmem>>, %arg4: memref<128x128xbf16, #tpu.memory_space<vmem>>, %arg5: memref<1x128xf32, #tpu.memory_space<vmem>>, %arg6: memref<128x128xbf16, #tpu.memory_space<vmem>>, %arg7: memref<1x128xf32, #tpu.memory_space<vmem>>, %arg8: memref<16x128xf32, #tpu.memory_space<vmem>>) attributes {dimension_semantics = [#tpu.dimension_semantics<parallel>], iteration_bounds = array<i64: 1>, scalar_prefetch = 0 : i64, scratch_operands = 0 : i64, tpu.core_type = #tpu.core_type<tc>, window_params = [{transform_indices = @transform_0, window_bounds = array<i64: 16, 128>}, {pipeline_mode = #tpu.pipeline_mode<synchronous>, transform_indices = @transform_1, window_bounds = array<i64: 128, 128>}, {pipeline_mode = #tpu.pipeline_mode<synchronous>, transform_indices = @transform_2, window_bounds = array<i64: 1, 128>}, {pipeline_mode = #tpu.pipeline_mode<synchronous>, transform_indices = @transform_3, window_bounds = array<i64: 128, 128>}, {pipeline_mode = #tpu.pipeline_mode<synchronous>, transform_indices = @transform_4, window_bounds = array<i64: 1, 128>}, {pipeline_mode = #tpu.pipeline_mode<synchronous>, transform_indices = @transform_5, window_bounds = array<i64: 128, 128>}, {pipeline_mode = #tpu.pipeline_mode<synchronous>, transform_indices = @transform_6, window_bounds = array<i64: 1, 128>}, {transform_indices = @transform_7, window_bounds = array<i64: 16, 128>}]} {
    %c0 = arith.constant 0 : index
    %c0_0 = arith.constant 0 : index
    %0 = vector.load %arg1[%c0, %c0_0] : memref<16x128xf32, #tpu.memory_space<vmem>>, vector<16x128xf32>
    %1 = arith.truncf %0 : vector<16x128xf32> to vector<16x128xbf16>
    %c0_1 = arith.constant 0 : index
    %c0_2 = arith.constant 0 : index
    %2 = vector.load %arg2[%c0_1, %c0_2] : memref<128x128xbf16, #tpu.memory_space<vmem>>, vector<128x128xbf16>
    %cst = arith.constant dense<0.000000e+00> : vector<16x128xf32>
    %3 = tpu.matmul %1, %2, %cst {dimension_numbers = #tpu.dot_dimension_numbers<[1], [0], [0], [1], [0, 0, 1, 1], [], []>} : vector<16x128xbf16>, vector<128x128xbf16>, vector<16x128xf32> -> vector<16x128xf32>
    %c0_3 = arith.constant 0 : index
    %c0_4 = arith.constant 0 : index
    %4 = vector.load %arg3[%c0_3, %c0_4] : memref<1x128xf32, #tpu.memory_space<vmem>>, vector<1x128xf32>
    %5 = vector.broadcast %4 : vector<1x128xf32> to vector<16x128xf32>
    %6 = arith.addf %3, %5 : vector<16x128xf32>
    %cst_5 = arith.constant 0.000000e+00 : f32
    %7 = vector.broadcast %cst_5 : f32 to vector<16x128xf32>
    %8 = arith.maximumf %6, %7 : vector<16x128xf32>
    %9 = arith.truncf %8 : vector<16x128xf32> to vector<16x128xbf16>
    %c0_6 = arith.constant 0 : index
    %c0_7 = arith.constant 0 : index
    %10 = vector.load %arg4[%c0_6, %c0_7] : memref<128x128xbf16, #tpu.memory_space<vmem>>, vector<128x128xbf16>
    %cst_8 = arith.constant dense<0.000000e+00> : vector<16x128xf32>
    %11 = tpu.matmul %9, %10, %cst_8 {dimension_numbers = #tpu.dot_dimension_numbers<[1], [0], [0], [1], [0, 0, 1, 1], [], []>} : vector<16x128xbf16>, vector<128x128xbf16>, vector<16x128xf32> -> vector<16x128xf32>
    %c0_9 = arith.constant 0 : index
    %c0_10 = arith.constant 0 : index
    %12 = vector.load %arg5[%c0_9, %c0_10] : memref<1x128xf32, #tpu.memory_space<vmem>>, vector<1x128xf32>
    %13 = vector.broadcast %12 : vector<1x128xf32> to vector<16x128xf32>
    %14 = arith.addf %11, %13 : vector<16x128xf32>
    %cst_11 = arith.constant 0.000000e+00 : f32
    %15 = vector.broadcast %cst_11 : f32 to vector<16x128xf32>
    %16 = arith.maximumf %14, %15 : vector<16x128xf32>
    %17 = arith.truncf %16 : vector<16x128xf32> to vector<16x128xbf16>
    %c0_12 = arith.constant 0 : index
    %c0_13 = arith.constant 0 : index
    %18 = vector.load %arg6[%c0_12, %c0_13] : memref<128x128xbf16, #tpu.memory_space<vmem>>, vector<128x128xbf16>
    %cst_14 = arith.constant dense<0.000000e+00> : vector<16x128xf32>
    %19 = tpu.matmul %17, %18, %cst_14 {dimension_numbers = #tpu.dot_dimension_numbers<[1], [0], [0], [1], [0, 0, 1, 1], [], []>} : vector<16x128xbf16>, vector<128x128xbf16>, vector<16x128xf32> -> vector<16x128xf32>
    %c0_15 = arith.constant 0 : index
    %c0_16 = arith.constant 0 : index
    %20 = vector.load %arg7[%c0_15, %c0_16] : memref<1x128xf32, #tpu.memory_space<vmem>>, vector<1x128xf32>
    %21 = vector.broadcast %20 : vector<1x128xf32> to vector<16x128xf32>
    %22 = arith.addf %19, %21 : vector<16x128xf32>
    %c0_17 = arith.constant 0 : index
    %c0_18 = arith.constant 0 : index
    %23 = vector.load %arg8[%c0_17, %c0_18] : memref<16x128xf32, #tpu.memory_space<vmem>>, vector<16x128xf32>
    tpu.vector_store %arg8[%c0_17, %c0_18], %22 {strides = array<i32>} : memref<16x128xf32, #tpu.memory_space<vmem>>, vector<16x128xf32>,
    return
  }
  func.func @transform_0(%arg0: i32) -> (i32, i32) {
    %c0_i32 = arith.constant 0 : i32
    %c0_i32_0 = arith.constant 0 : i32
    return %arg0, %c0_i32 : i32, i32
  }
  func.func @transform_1(%arg0: i32) -> (i32, i32) {
    %c0_i32 = arith.constant 0 : i32
    %c0_i32_0 = arith.constant 0 : i32
    %c0_i32_1 = arith.constant 0 : i32
    return %c0_i32, %c0_i32_0 : i32, i32
  }
  func.func @transform_2(%arg0: i32) -> (i32, i32) {
    %c0_i32 = arith.constant 0 : i32
    %c0_i32_0 = arith.constant 0 : i32
    %c0_i32_1 = arith.constant 0 : i32
    return %c0_i32, %c0_i32_0 : i32, i32
  }
  func.func @transform_3(%arg0: i32) -> (i32, i32) {
    %c0_i32 = arith.constant 0 : i32
    %c0_i32_0 = arith.constant 0 : i32
    %c0_i32_1 = arith.constant 0 : i32
    return %c0_i32, %c0_i32_0 : i32, i32
  }
  func.func @transform_4(%arg0: i32) -> (i32, i32) {
    %c0_i32 = arith.constant 0 : i32
    %c0_i32_0 = arith.constant 0 : i32
    %c0_i32_1 = arith.constant 0 : i32
    return %c0_i32, %c0_i32_0 : i32, i32
  }
  func.func @transform_5(%arg0: i32) -> (i32, i32) {
    %c0_i32 = arith.constant 0 : i32
    %c0_i32_0 = arith.constant 0 : i32
    %c0_i32_1 = arith.constant 0 : i32
    return %c0_i32, %c0_i32_0 : i32, i32
  }
  func.func @transform_6(%arg0: i32) -> (i32, i32) {
    %c0_i32 = arith.constant 0 : i32
    %c0_i32_0 = arith.constant 0 : i32
    %c0_i32_1 = arith.constant 0 : i32
    return %c0_i32, %c0_i32_0 : i32, i32
  }
  func.func @transform_7(%arg0: i32) -> (i32, i32) {
    %c0_i32 = arith.constant 0 : i32
    %c0_i32_0 = arith.constant 0 : i32
    return %arg0, %c0_i32 : i32, i32
  }
}

module attributes {stable_mosaic.version = 11 : i64} {
  func.func @_mlp_group_kernel(%arg0: i32, %arg1: memref<16x128xf32, #tpu.memory_space<vmem>>, %arg2: memref<128x128xbf16, #tpu.memory_space<vmem>>, %arg3: memref<1x128xf32, #tpu.memory_space<vmem>>, %arg4: memref<128x128xbf16, #tpu.memory_space<vmem>>, %arg5: memref<1x128xf32, #tpu.memory_space<vmem>>, %arg6: memref<128x128xbf16, #tpu.memory_space<vmem>>, %arg7: memref<1x128xf32, #tpu.memory_space<vmem>>, %arg8: memref<16x128xf32, #tpu.memory_space<vmem>>) attributes {dimension_semantics = [#tpu.dimension_semantics<parallel>], iteration_bounds = array<i64: 1>, scalar_prefetch = 0 : i64, scratch_operands = 0 : i64, tpu.core_type = #tpu.core_type<tc>, window_params = [{transform_indices = @transform_0, window_bounds = array<i64: 16, 128>}, {pipeline_mode = #tpu.pipeline_mode<synchronous>, transform_indices = @transform_1, window_bounds = array<i64: 128, 128>}, {pipeline_mode = #tpu.pipeline_mode<synchronous>, transform_indices = @transform_2, window_bounds = array<i64: 1, 128>}, {pipeline_mode = #tpu.pipeline_mode<synchronous>, transform_indices = @transform_3, window_bounds = array<i64: 128, 128>}, {pipeline_mode = #tpu.pipeline_mode<synchronous>, transform_indices = @transform_4, window_bounds = array<i64: 1, 128>}, {pipeline_mode = #tpu.pipeline_mode<synchronous>, transform_indices = @transform_5, window_bounds = array<i64: 128, 128>}, {pipeline_mode = #tpu.pipeline_mode<synchronous>, transform_indices = @transform_6, window_bounds = array<i64: 1, 128>}, {transform_indices = @transform_7, window_bounds = array<i64: 16, 128>}]} {
    %c0 = arith.constant 0 : index
    %c0_0 = arith.constant 0 : index
    %0 = vector.load %arg1[%c0, %c0_0] : memref<16x128xf32, #tpu.memory_space<vmem>>, vector<16x128xf32>
    %1 = arith.truncf %0 : vector<16x128xf32> to vector<16x128xbf16>
    %c0_1 = arith.constant 0 : index
    %c0_2 = arith.constant 0 : index
    %2 = vector.load %arg2[%c0_1, %c0_2] : memref<128x128xbf16, #tpu.memory_space<vmem>>, vector<128x128xbf16>
    %cst = arith.constant dense<0.000000e+00> : vector<16x128xf32>
    %3 = tpu.matmul %1, %2, %cst {dimension_numbers = #tpu.dot_dimension_numbers<[1], [0], [0], [1], [0, 0, 1, 1], [], []>} : vector<16x128xbf16>, vector<128x128xbf16>, vector<16x128xf32> -> vector<16x128xf32>
    %c0_3 = arith.constant 0 : index
    %c0_4 = arith.constant 0 : index
    %4 = vector.load %arg3[%c0_3, %c0_4] : memref<1x128xf32, #tpu.memory_space<vmem>>, vector<1x128xf32>
    %5 = vector.broadcast %4 : vector<1x128xf32> to vector<16x128xf32>
    %6 = arith.addf %3, %5 : vector<16x128xf32>
    %cst_5 = arith.constant 0.000000e+00 : f32
    %7 = vector.broadcast %cst_5 : f32 to vector<16x128xf32>
    %8 = arith.maximumf %6, %7 : vector<16x128xf32>
    %9 = arith.truncf %8 : vector<16x128xf32> to vector<16x128xbf16>
    %c0_6 = arith.constant 0 : index
    %c0_7 = arith.constant 0 : index
    %10 = vector.load %arg4[%c0_6, %c0_7] : memref<128x128xbf16, #tpu.memory_space<vmem>>, vector<128x128xbf16>
    %cst_8 = arith.constant dense<0.000000e+00> : vector<16x128xf32>
    %11 = tpu.matmul %9, %10, %cst_8 {dimension_numbers = #tpu.dot_dimension_numbers<[1], [0], [0], [1], [0, 0, 1, 1], [], []>} : vector<16x128xbf16>, vector<128x128xbf16>, vector<16x128xf32> -> vector<16x128xf32>
    %c0_9 = arith.constant 0 : index
    %c0_10 = arith.constant 0 : index
    %12 = vector.load %arg5[%c0_9, %c0_10] : memref<1x128xf32, #tpu.memory_space<vmem>>, vector<1x128xf32>
    %13 = vector.broadcast %12 : vector<1x128xf32> to vector<16x128xf32>
    %14 = arith.addf %11, %13 : vector<16x128xf32>
    %cst_11 = arith.constant 0.000000e+00 : f32
    %15 = vector.broadcast %cst_11 : f32 to vector<16x128xf32>
    %16 = arith.maximumf %14, %15 : vector<16x128xf32>
    %17 = arith.truncf %16 : vector<16x128xf32> to vector<16x128xbf16>
    %c0_12 = arith.constant 0 : index
    %c0_13 = arith.constant 0 : index
    %18 = vector.load %arg6[%c0_12, %c0_13] : memref<128x128xbf16, #tpu.memory_space<vmem>>, vector<128x128xbf16>
    %cst_14 = arith.constant dense<0.000000e+00> : vector<16x128xf32>
    %19 = tpu.matmul %17, %18, %cst_14 {dimension_numbers = #tpu.dot_dimension_numbers<[1], [0], [0], [1], [0, 0, 1, 1], [], []>} : vector<16x128xbf16>, vector<128x128xbf16>, vector<16x128xf32> -> vector<16x128xf32>
    %c0_15 = arith.constant 0 : index
    %c0_16 = arith.constant 0 : index
    %20 = vector.load %arg7[%c0_15, %c0_16] : memref<1x128xf32, #tpu.memory_space<vmem>>, vector<1x128xf32>
    %21 = vector.broadcast %20 : vector<1x128xf32> to vector<16x128xf32>
    %22 = arith.addf %19, %21 : vector<16x128xf32>
    %c0_17 = arith.constant 0 : index
    %c0_18 = arith.constant 0 : index
    %23 = vector.load %arg8[%c0_17, %c0_18] : memref<16x128xf32, #tpu.memory_space<vmem>>, vector<16x128xf32>
    tpu.vector_store %arg8[%c0_17, %c0_18], %22 {strides = array<i32>} : memref<16x128xf32, #tpu.memory_space<vmem>>, vector<16x128xf32>,
    return
  }
  func.func @transform_0(%arg0: i32) -> (i32, i32) {
    %c0_i32 = arith.constant 0 : i32
    %c0_i32_0 = arith.constant 0 : i32
    return %arg0, %c0_i32 : i32, i32
  }
  func.func @transform_1(%arg0: i32) -> (i32, i32) {
    %c0_i32 = arith.constant 0 : i32
    %c0_i32_0 = arith.constant 0 : i32
    %c0_i32_1 = arith.constant 0 : i32
    return %c0_i32, %c0_i32_0 : i32, i32
  }
  func.func @transform_2(%arg0: i32) -> (i32, i32) {
    %c0_i32 = arith.constant 0 : i32
    %c0_i32_0 = arith.constant 0 : i32
    %c0_i32_1 = arith.constant 0 : i32
    return %c0_i32, %c0_i32_0 : i32, i32
  }
  func.func @transform_3(%arg0: i32) -> (i32, i32) {
    %c0_i32 = arith.constant 0 : i32
    %c0_i32_0 = arith.constant 0 : i32
    %c0_i32_1 = arith.constant 0 : i32
    return %c0_i32, %c0_i32_0 : i32, i32
  }
  func.func @transform_4(%arg0: i32) -> (i32, i32) {
    %c0_i32 = arith.constant 0 : i32
    %c0_i32_0 = arith.constant 0 : i32
    %c0_i32_1 = arith.constant 0 : i32
    return %c0_i32, %c0_i32_0 : i32, i32
  }
  func.func @transform_5(%arg0: i32) -> (i32, i32) {
    %c0_i32 = arith.constant 0 : i32
    %c0_i32_0 = arith.constant 0 : i32
    %c0_i32_1 = arith.constant 0 : i32
    return %c0_i32, %c0_i32_0 : i32, i32
  }
  func.func @transform_6(%arg0: i32) -> (i32, i32) {
    %c0_i32 = arith.constant 0 : i32
    %c0_i32_0 = arith.constant 0 : i32
    %c0_i32_1 = arith.constant 0 : i32
    return %c0_i32, %c0_i32_0 : i32, i32
  }
  func.func @transform_7(%arg0: i32) -> (i32, i32) {
    %c0_i32 = arith.constant 0 : i32
    %c0_i32_0 = arith.constant 0 : i32
    return %arg0, %c0_i32 : i32, i32
  }
}

</mosaic_0001>

<llo_original>
// kernel: mlp_forward_pallas.1
$region0: #{mlp_forward_pallas.1}
  #allocation0 [shape = 'u32[]', space=smem, size = 0x4, offset = 0x4, fixed_abs, tag = 'smem constant byte address 0x4 - core index']
  #allocation1 [shape = 'u32[144,128]{1,0:T(1,128)}', space=vmem, size = 0x12000, scoped, tag = 'internal scratch']
  %s0 = inlined_call_operand.vmem [shape: f32[16,128], index: 0, kind: input, shape index: {}]
  %s1 = inlined_call_operand.hbm [shape: bf16[128,128], index: 1, kind: input, shape index: {}]
  %s2 = inlined_call_operand.vmem [shape: f32[1,128], index: 2, kind: input, shape index: {}]
  %s3 = inlined_call_operand.hbm [shape: bf16[128,128], index: 3, kind: input, shape index: {}]
  %s4 = inlined_call_operand.vmem [shape: f32[1,128], index: 4, kind: input, shape index: {}]
  %s5 = inlined_call_operand.hbm [shape: bf16[128,128], index: 5, kind: input, shape index: {}]
  %s6 = inlined_call_operand.vmem [shape: f32[1,128], index: 6, kind: input, shape index: {}]
  %s7 = inlined_call_operand.vmem [shape: f32[16,128], index: 7, kind: output, shape index: {}]
  %s8 = sld [smem:[#allocation0]]
  $region50: #{mlp_forward_pallas.1} parent=0
    _
  %s10 = ssub.s32 1, %s8
  %s11 = scalar_select 0, %s10, %s8
  $region1: #{mlp_forward_pallas.1} parent=0
    #allocation2 [shape = 'u8[32768]{0}', space=vmem, size = 0x8000, scoped, tag = 'input window, operand 1, single buffered']
    #allocation3 [shape = 's32[1]{0}', space=sflag, size = 0x4, scoped, tag = 'scoped memory for mlp_forward_pallas.1']
    #allocation4 [shape = 'u8[32768]{0}', space=vmem, size = 0x8000, scoped, tag = 'input window, operand 3, single buffered']
    #allocation5 [shape = 's32[1]{0}', space=sflag, size = 0x4, scoped, tag = 'scoped memory for mlp_forward_pallas.1']
    #allocation6 [shape = 'u8[32768]{0}', space=vmem, size = 0x8000, scoped, tag = 'input window, operand 5, single buffered']
    %12 = vsyncpa [#allocation3], 0
    %13 = vsyncpa [#allocation5], 0
    // Predicated region
    $region2: #{mlp_forward_pallas.1} parent=1 // pred_check
      _
    $region3: #{mlp_forward_pallas.1} parent=1 // pred_check_branch
      %15 = sbr.rel (0) target = $region5
    $region4: #{mlp_forward_pallas.1} parent=1 // pred_region
      _
    $region5: #{mlp_forward_pallas.1} parent=1 // pred_fallthru
      _
    // Predicated region
    $region6: #{mlp_forward_pallas.1} parent=1 // pred_check
      _
    $region7: #{mlp_forward_pallas.1} parent=1 // pred_check_branch
      %17 = sbr.rel (0) target = $region9
    $region8: #{mlp_forward_pallas.1} parent=1 // pred_region
      %s19 = ssub.s32 1024, 1024
      %20 = vsyncadd [#allocation3], %s19
      %s21 = sshll.u32 [#allocation2], 4
      %s22 = int_to_ptr.vmem [resolvable:$true] %s21
      %27 = dma.hbm_to_vmem [thread:$0]  %s1, 1024, %s22, [#allocation3], 64, 64, 4
    $region9: #{mlp_forward_pallas.1} parent=1 // pred_fallthru
      _
    // Predicated region
    $region10: #{mlp_forward_pallas.1} parent=1 // pred_check
      _
    $region11: #{mlp_forward_pallas.1} parent=1 // pred_check_branch
      %29 = sbr.rel (0) target = $region13
    $region12: #{mlp_forward_pallas.1} parent=1 // pred_region
      _
    $region13: #{mlp_forward_pallas.1} parent=1 // pred_fallthru
      _
    // Predicated region
    $region14: #{mlp_forward_pallas.1} parent=1 // pred_check
      _
    $region15: #{mlp_forward_pallas.1} parent=1 // pred_check_branch
      %31 = sbr.rel (0) target = $region17
    $region16: #{mlp_forward_pallas.1} parent=1 // pred_region
      %s33 = ssub.s32 1024, 1024
      %34 = vsyncadd [#allocation5], %s33
      %s35 = sshll.u32 [#allocation4], 4
      %s36 = int_to_ptr.vmem [resolvable:$true] %s35
      %41 = dma.hbm_to_vmem [thread:$0]  %s3, 1024, %s36, [#allocation5], 64, 64, 4
    $region17: #{mlp_forward_pallas.1} parent=1 // pred_fallthru
      _
    // Predicated region
    $region18: #{mlp_forward_pallas.1} parent=1 // pred_check
      _
    $region19: #{mlp_forward_pallas.1} parent=1 // pred_check_branch
      %43 = sbr.rel (0) target = $region21
    $region20: #{mlp_forward_pallas.1} parent=1 // pred_region
      _
    $region21: #{mlp_forward_pallas.1} parent=1 // pred_fallthru
      _
    // Predicated region
    $region22: #{mlp_forward_pallas.1} parent=1 // pred_check
      _
    $region23: #{mlp_forward_pallas.1} parent=1 // pred_check_branch
      %45 = sbr.rel (0) target = $region25
    $region24: #{mlp_forward_pallas.1} parent=1 // pred_region
      %s47 = ssub.s32 1024, 1024
      %48 = vsyncadd [#allocation5], %s47
      %s49 = sshll.u32 [#allocation6], 4
      %s50 = int_to_ptr.vmem [resolvable:$true] %s49
      %55 = dma.hbm_to_vmem [thread:$0]  %s5, 1024, %s50, [#allocation5], 64, 64, 4
    $region25: #{mlp_forward_pallas.1} parent=1 // pred_fallthru
      _
    // Predicated region
    $region26: #{mlp_forward_pallas.1} parent=1 // pred_check
      _
    $region27: #{mlp_forward_pallas.1} parent=1 // pred_check_branch
      %57 = sbr.rel (0) target = $region29
    $region28: #{mlp_forward_pallas.1} parent=1 // pred_region
      _
    $region29: #{mlp_forward_pallas.1} parent=1 // pred_fallthru
      _
    // Predicated region
    $region30: #{mlp_forward_pallas.1} parent=1 // pred_check
      _
    $region31: #{mlp_forward_pallas.1} parent=1 // pred_check_branch
      %59 = sbr.rel (0) target = $region33
    $region32: #{mlp_forward_pallas.1} parent=1 // pred_region
      %60 = dma.done [#allocation3], 1024
    $region33: #{mlp_forward_pallas.1} parent=1 // pred_fallthru
      _
    // Predicated region
    $region34: #{mlp_forward_pallas.1} parent=1 // pred_check
      _
    $region35: #{mlp_forward_pallas.1} parent=1 // pred_check_branch
      %62 = sbr.rel (0) target = $region37
    $region36: #{mlp_forward_pallas.1} parent=1 // pred_region
      %63 = dma.done [#allocation5], 1024
    $region37: #{mlp_forward_pallas.1} parent=1 // pred_fallthru
      _
    // Predicated region
    $region38: #{mlp_forward_pallas.1} parent=1 // pred_check
      _
    $region39: #{mlp_forward_pallas.1} parent=1 // pred_check_branch
      %65 = sbr.rel (0) target = $region41
    $region40: #{mlp_forward_pallas.1} parent=1 // pred_region
      %66 = dma.done [#allocation5], 1024
    $region41: #{mlp_forward_pallas.1} parent=1 // pred_fallthru
      _
    %v68 = vld [vmem:[%s0] sm:$0xff]
    %v69 = vld [vmem:[%s0 + $0x8] sm:$0xff]
    %v70 = vpack.c.bf16 %v69, %v68
    %v71 = vld [vmem:[#allocation2] sm:$0xf]
    %v72 = vld [vmem:[#allocation2 + $0x4] sm:$0xf]
    %v73 = vld [vmem:[#allocation2 + $0x8] sm:$0xf]
    %v74 = vld [vmem:[#allocation2 + $0xc] sm:$0xf]
    %v75 = vld [vmem:[#allocation2 + $0x10] sm:$0xf]
    %v76 = vld [vmem:[#allocation2 + $0x14] sm:$0xf]
    %v77 = vld [vmem:[#allocation2 + $0x18] sm:$0xf]
    %v78 = vld [vmem:[#allocation2 + $0x1c] sm:$0xf]
    %v79 = vld [vmem:[#allocation2 + $0x20] sm:$0xf]
    %v80 = vld [vmem:[#allocation2 + $0x24] sm:$0xf]
    %v81 = vld [vmem:[#allocation2 + $0x28] sm:$0xf]
    %v82 = vld [vmem:[#allocation2 + $0x2c] sm:$0xf]
    %v83 = vld [vmem:[#allocation2 + $0x30] sm:$0xf]
    %v84 = vld [vmem:[#allocation2 + $0x34] sm:$0xf]
    %v85 = vld [vmem:[#allocation2 + $0x38] sm:$0xf]
    %v86 = vld [vmem:[#allocation2 + $0x3c] sm:$0xf]
    %v87 = vld [vmem:[%s2] sm:$0x1]
    %v89 = vlaneseq
    %v90 = vshrl.u32 %v89, 7
    %v91 = vsub.s32 0, %v90
    %v92 = vrot.slane %v87, %v91
    %v110 = vunpack.c.l.b16 %v71
    %v111 = vunpack.c.l.b16 %v72
    %v112 = vunpack.c.l.b16 %v73
    %v113 = vunpack.c.l.b16 %v74
    %v114 = vunpack.c.l.b16 %v75
    %v115 = vunpack.c.l.b16 %v76
    %v116 = vunpack.c.l.b16 %v77
    %v117 = vunpack.c.l.b16 %v78
    %v118 = vunpack.c.l.b16 %v79
    %v119 = vunpack.c.l.b16 %v80
    %v120 = vunpack.c.l.b16 %v81
    %v121 = vunpack.c.l.b16 %v82
    %v122 = vunpack.c.l.b16 %v83
    %v123 = vunpack.c.l.b16 %v84
    %v124 = vunpack.c.l.b16 %v85
    %v125 = vunpack.c.l.b16 %v86
    %v126 = vpack.c.b16 %v111, %v110
    %v127 = vpack.c.b16 %v113, %v112
    %v128 = vpack.c.b16 %v115, %v114
    %v129 = vpack.c.b16 %v117, %v116
    %v130 = vpack.c.b16 %v119, %v118
    %v131 = vpack.c.b16 %v121, %v120
    %v132 = vpack.c.b16 %v123, %v122
    %v133 = vpack.c.b16 %v125, %v124
    %142 = vmatprep.subr.bf16.mxu0 0
    %143 = vmatpush1.bf16.msra.mxu0 %v126
    %144 = vmatprep.subr.bf16.mxu0 0
    %145 = vmatpush1.bf16.msra.mxu0 %v127
    %146 = vmatprep.subr.bf16.mxu0 0
    %147 = vmatpush1.bf16.msra.mxu0 %v128
    %148 = vmatprep.subr.bf16.mxu0 0
    %149 = vmatpush1.bf16.msra.mxu0 %v129
    %150 = vmatprep.subr.bf16.mxu0 0
    %151 = vmatpush1.bf16.msra.mxu0 %v130
    %152 = vmatprep.subr.bf16.mxu0 0
    %153 = vmatpush1.bf16.msra.mxu0 %v131
    %154 = vmatprep.subr.bf16.mxu0 0
    %155 = vmatpush1.bf16.msra.mxu0 %v132
    %156 = vmatprep.subr.bf16.mxu0 0
    %157 = vmatpush1.bf16.msra.mxu0 %v133
    %158 = vmatprep.subr.bf16.mxu0 0
    %159 = vmatpush1.bf16.msra.mxu0 0
    %160 = vmatprep.subr.bf16.mxu0 0
    %161 = vmatpush1.bf16.msra.mxu0 0
    %162 = vmatprep.subr.bf16.mxu0 0
    %163 = vmatpush1.bf16.msra.mxu0 0
    %164 = vmatprep.subr.bf16.mxu0 0
    %165 = vmatpush1.bf16.msra.mxu0 0
    %166 = vmatprep.subr.bf16.mxu0 0
    %167 = vmatpush1.bf16.msra.mxu0 0
    %168 = vmatprep.subr.bf16.mxu0 0
    %169 = vmatpush1.bf16.msra.mxu0 0
    %170 = vmatprep.subr.bf16.mxu0 0
    %171 = vmatpush1.bf16.msra.mxu0 0
    %172 = vmatprep.subr.bf16.mxu0 0
    %173 = vmatpush1.bf16.msra.mxu0 0
    %174 = vmatprep.mubr.bf16.mxu0 0
    %175 = vmatmul.mubr.bf16.gmra.mrb[0].mxu0 %v70
    %v176 = vpop.f32.mrb[0].mxu0
    %v177 = vadd.f32 %v92, %v176
    %v178 = vpop.f32.mrb[0].mxu0
    %v179 = vpop.f32.mrb[0].mxu0
    %v180 = vadd.f32 %v92, %v179
    %v181 = vpop.f32.mrb[0].mxu0
    %182 = vdwg.mxu0
    %v183 = vmax.f32 %v177, 0.0
    %v184 = vmax.f32 %v180, 0.0
    %v185 = vpack.c.bf16 %v184, %v183
    %v186 = vld [vmem:[#allocation4] sm:$0xf]
    %v187 = vld [vmem:[#allocation4 + $0x4] sm:$0xf]
    %v188 = vld [vmem:[#allocation4 + $0x8] sm:$0xf]
    %v189 = vld [vmem:[#allocation4 + $0xc] sm:$0xf]
    %v190 = vld [vmem:[#allocation4 + $0x10] sm:$0xf]
    %v191 = vld [vmem:[#allocation4 + $0x14] sm:$0xf]
    %v192 = vld [vmem:[#allocation4 + $0x18] sm:$0xf]
    %v193 = vld [vmem:[#allocation4 + $0x1c] sm:$0xf]
    %v194 = vld [vmem:[#allocation4 + $0x20] sm:$0xf]
    %v195 = vld [vmem:[#allocation4 + $0x24] sm:$0xf]
    %v196 = vld [vmem:[#allocation4 + $0x28] sm:$0xf]
    %v197 = vld [vmem:[#allocation4 + $0x2c] sm:$0xf]
    %v198 = vld [vmem:[#allocation4 + $0x30] sm:$0xf]
    %v199 = vld [vmem:[#allocation4 + $0x34] sm:$0xf]
    %v200 = vld [vmem:[#allocation4 + $0x38] sm:$0xf]
    %v201 = vld [vmem:[#allocation4 + $0x3c] sm:$0xf]
    %v202 = vld [vmem:[%s4] sm:$0x1]
    %v204 = vlaneseq
    %v205 = vshrl.u32 %v204, 7
    %v206 = vsub.s32 0, %v205
    %v207 = vrot.slane %v202, %v206
    %v225 = vunpack.c.l.b16 %v186
    %v226 = vunpack.c.l.b16 %v187
    %v227 = vunpack.c.l.b16 %v188
    %v228 = vunpack.c.l.b16 %v189
    %v229 = vunpack.c.l.b16 %v190
    %v230 = vunpack.c.l.b16 %v191
    %v231 = vunpack.c.l.b16 %v192
    %v232 = vunpack.c.l.b16 %v193
    %v233 = vunpack.c.l.b16 %v194
    %v234 = vunpack.c.l.b16 %v195
    %v235 = vunpack.c.l.b16 %v196
    %v236 = vunpack.c.l.b16 %v197
    %v237 = vunpack.c.l.b16 %v198
    %v238 = vunpack.c.l.b16 %v199
    %v239 = vunpack.c.l.b16 %v200
    %v240 = vunpack.c.l.b16 %v201
    %v241 = vpack.c.b16 %v226, %v225
    %v242 = vpack.c.b16 %v228, %v227
    %v243 = vpack.c.b16 %v230, %v229
    %v244 = vpack.c.b16 %v232, %v231
    %v245 = vpack.c.b16 %v234, %v233
    %v246 = vpack.c.b16 %v236, %v235
    %v247 = vpack.c.b16 %v238, %v237
    %v248 = vpack.c.b16 %v240, %v239
    %257 = vmatprep.subr.bf16.mxu0 0
    %258 = vmatpush1.bf16.msra.mxu0 %v241
    %259 = vmatprep.subr.bf16.mxu0 0
    %260 = vmatpush1.bf16.msra.mxu0 %v242
    %261 = vmatprep.subr.bf16.mxu0 0
    %262 = vmatpush1.bf16.msra.mxu0 %v243
    %263 = vmatprep.subr.bf16.mxu0 0
    %264 = vmatpush1.bf16.msra.mxu0 %v244
    %265 = vmatprep.subr.bf16.mxu0 0
    %266 = vmatpush1.bf16.msra.mxu0 %v245
    %267 = vmatprep.subr.bf16.mxu0 0
    %268 = vmatpush1.bf16.msra.mxu0 %v246
    %269 = vmatprep.subr.bf16.mxu0 0
    %270 = vmatpush1.bf16.msra.mxu0 %v247
    %271 = vmatprep.subr.bf16.mxu0 0
    %272 = vmatpush1.bf16.msra.mxu0 %v248
    %273 = vmatprep.subr.bf16.mxu0 0
    %274 = vmatpush1.bf16.msra.mxu0 0
    %275 = vmatprep.subr.bf16.mxu0 0
    %276 = vmatpush1.bf16.msra.mxu0 0
    %277 = vmatprep.subr.bf16.mxu0 0
    %278 = vmatpush1.bf16.msra.mxu0 0
    %279 = vmatprep.subr.bf16.mxu0 0
    %280 = vmatpush1.bf16.msra.mxu0 0
    %281 = vmatprep.subr.bf16.mxu0 0
    %282 = vmatpush1.bf16.msra.mxu0 0
    %283 = vmatprep.subr.bf16.mxu0 0
    %284 = vmatpush1.bf16.msra.mxu0 0
    %285 = vmatprep.subr.bf16.mxu0 0
    %286 = vmatpush1.bf16.msra.mxu0 0
    %287 = vmatprep.subr.bf16.mxu0 0
    %288 = vmatpush1.bf16.msra.mxu0 0
    %289 = vmatprep.mubr.bf16.mxu0 0
    %290 = vmatmul.mubr.bf16.gmra.mrb[0].mxu0 %v185
    %v291 = vpop.f32.mrb[0].mxu0
    %v292 = vadd.f32 %v207, %v291
    %v293 = vpop.f32.mrb[0].mxu0
    %v294 = vpop.f32.mrb[0].mxu0
    %v295 = vadd.f32 %v207, %v294
    %v296 = vpop.f32.mrb[0].mxu0
    %297 = vdwg.mxu0
    %v298 = vmax.f32 %v292, 0.0
    %v299 = vmax.f32 %v295, 0.0
    %v300 = vpack.c.bf16 %v299, %v298
    %v301 = vld [vmem:[#allocation6] sm:$0xf]
    %v302 = vld [vmem:[#allocation6 + $0x4] sm:$0xf]
    %v303 = vld [vmem:[#allocation6 + $0x8] sm:$0xf]
    %v304 = vld [vmem:[#allocation6 + $0xc] sm:$0xf]
    %v305 = vld [vmem:[#allocation6 + $0x10] sm:$0xf]
    %v306 = vld [vmem:[#allocation6 + $0x14] sm:$0xf]
    %v307 = vld [vmem:[#allocation6 + $0x18] sm:$0xf]
    %v308 = vld [vmem:[#allocation6 + $0x1c] sm:$0xf]
    %v309 = vld [vmem:[#allocation6 + $0x20] sm:$0xf]
    %v310 = vld [vmem:[#allocation6 + $0x24] sm:$0xf]
    %v311 = vld [vmem:[#allocation6 + $0x28] sm:$0xf]
    %v312 = vld [vmem:[#allocation6 + $0x2c] sm:$0xf]
    %v313 = vld [vmem:[#allocation6 + $0x30] sm:$0xf]
    %v314 = vld [vmem:[#allocation6 + $0x34] sm:$0xf]
    %v315 = vld [vmem:[#allocation6 + $0x38] sm:$0xf]
    %v316 = vld [vmem:[#allocation6 + $0x3c] sm:$0xf]
    %v317 = vld [vmem:[%s6] sm:$0x1]
    %v319 = vlaneseq
    %v320 = vshrl.u32 %v319, 7
    %v321 = vsub.s32 0, %v320
    %v322 = vrot.slane %v317, %v321
    %v340 = vunpack.c.l.b16 %v301
    %v341 = vunpack.c.l.b16 %v302
    %v342 = vunpack.c.l.b16 %v303
    %v343 = vunpack.c.l.b16 %v304
    %v344 = vunpack.c.l.b16 %v305
    %v345 = vunpack.c.l.b16 %v306
    %v346 = vunpack.c.l.b16 %v307
    %v347 = vunpack.c.l.b16 %v308
    %v348 = vunpack.c.l.b16 %v309
    %v349 = vunpack.c.l.b16 %v310
    %v350 = vunpack.c.l.b16 %v311
    %v351 = vunpack.c.l.b16 %v312
    %v352 = vunpack.c.l.b16 %v313
    %v353 = vunpack.c.l.b16 %v314
    %v354 = vunpack.c.l.b16 %v315
    %v355 = vunpack.c.l.b16 %v316
    %v356 = vpack.c.b16 %v341, %v340
    %v357 = vpack.c.b16 %v343, %v342
    %v358 = vpack.c.b16 %v345, %v344
    %v359 = vpack.c.b16 %v347, %v346
    %v360 = vpack.c.b16 %v349, %v348
    %v361 = vpack.c.b16 %v351, %v350
    %v362 = vpack.c.b16 %v353, %v352
    %v363 = vpack.c.b16 %v355, %v354
    %372 = vmatprep.subr.bf16.mxu0 0
    %373 = vmatpush1.bf16.msra.mxu0 %v356
    %374 = vmatprep.subr.bf16.mxu0 0
    %375 = vmatpush1.bf16.msra.mxu0 %v357
    %376 = vmatprep.subr.bf16.mxu0 0
    %377 = vmatpush1.bf16.msra.mxu0 %v358
    %378 = vmatprep.subr.bf16.mxu0 0
    %379 = vmatpush1.bf16.msra.mxu0 %v359
    %380 = vmatprep.subr.bf16.mxu0 0
    %381 = vmatpush1.bf16.msra.mxu0 %v360
    %382 = vmatprep.subr.bf16.mxu0 0
    %383 = vmatpush1.bf16.msra.mxu0 %v361
    %384 = vmatprep.subr.bf16.mxu0 0
    %385 = vmatpush1.bf16.msra.mxu0 %v362
    %386 = vmatprep.subr.bf16.mxu0 0
    %387 = vmatpush1.bf16.msra.mxu0 %v363
    %388 = vmatprep.subr.bf16.mxu0 0
    %389 = vmatpush1.bf16.msra.mxu0 0
    %390 = vmatprep.subr.bf16.mxu0 0
    %391 = vmatpush1.bf16.msra.mxu0 0
    %392 = vmatprep.subr.bf16.mxu0 0
    %393 = vmatpush1.bf16.msra.mxu0 0
    %394 = vmatprep.subr.bf16.mxu0 0
    %395 = vmatpush1.bf16.msra.mxu0 0
    %396 = vmatprep.subr.bf16.mxu0 0
    %397 = vmatpush1.bf16.msra.mxu0 0
    %398 = vmatprep.subr.bf16.mxu0 0
    %399 = vmatpush1.bf16.msra.mxu0 0
    %400 = vmatprep.subr.bf16.mxu0 0
    %401 = vmatpush1.bf16.msra.mxu0 0
    %402 = vmatprep.subr.bf16.mxu0 0
    %403 = vmatpush1.bf16.msra.mxu0 0
    %404 = vmatprep.mubr.bf16.mxu0 0
    %405 = vmatmul.mubr.bf16.gmra.mrb[0].mxu0 %v300
    %v406 = vpop.f32.mrb[0].mxu0
    %v407 = vadd.f32 %v322, %v406
    %v408 = vpop.f32.mrb[0].mxu0
    %v409 = vpop.f32.mrb[0].mxu0
    %v410 = vadd.f32 %v322, %v409
    %v411 = vpop.f32.mrb[0].mxu0
    %412 = vdwg.mxu0
    %413 = vst [vmem:[%s7] sm:$0xff] %v407
    %414 = vst [vmem:[%s7 + $0x8] sm:$0xff] %v410
    // Predicated region
    $region42: #{mlp_forward_pallas.1} parent=1 // pred_check
      _
    $region43: #{mlp_forward_pallas.1} parent=1 // pred_check_branch
      %416 = sbr.rel (0) target = $region45
    $region44: #{mlp_forward_pallas.1} parent=1 // pred_region
      _
    $region45: #{mlp_forward_pallas.1} parent=1 // pred_fallthru
      _
    // Predicated region
    $region46: #{mlp_forward_pallas.1} parent=1 // pred_check
      _
    $region47: #{mlp_forward_pallas.1} parent=1 // pred_check_branch
      %418 = sbr.rel (0) target = $region49
    $region48: #{mlp_forward_pallas.1} parent=1 // pred_region
      _
    $region49: #{mlp_forward_pallas.1} parent=1 // pred_fallthru
      _
    %419 = vsyncpa [#allocation3], 1
    %420 = vsyncpa [#allocation5], 1

// kernel: mlp_forward_pallas.1
$region0: #{mlp_forward_pallas.1}
  #allocation0 [shape = 'u32[]', space=smem, size = 0x4, offset = 0x4, fixed_abs, tag = 'smem constant byte address 0x4 - core index']
  #allocation1 [shape = 'u32[144,128]{1,0:T(1,128)}', space=vmem, size = 0x12000, scoped, tag = 'internal scratch']
  %s0 = inlined_call_operand.vmem [shape: f32[16,128], index: 0, kind: input, shape index: {}]
  %s1 = inlined_call_operand.hbm [shape: bf16[128,128], index: 1, kind: input, shape index: {}]
  %s2 = inlined_call_operand.vmem [shape: f32[1,128], index: 2, kind: input, shape index: {}]
  %s3 = inlined_call_operand.hbm [shape: bf16[128,128], index: 3, kind: input, shape index: {}]
  %s4 = inlined_call_operand.vmem [shape: f32[1,128], index: 4, kind: input, shape index: {}]
  %s5 = inlined_call_operand.hbm [shape: bf16[128,128], index: 5, kind: input, shape index: {}]
  %s6 = inlined_call_operand.vmem [shape: f32[1,128], index: 6, kind: input, shape index: {}]
  %s7 = inlined_call_operand.vmem [shape: f32[16,128], index: 7, kind: output, shape index: {}]
  %s8 = sld [smem:[#allocation0]]
  $region50: #{mlp_forward_pallas.1} parent=0
    _
  %s10 = ssub.s32 1, %s8
  %s11 = scalar_select 0, %s10, %s8
  $region1: #{mlp_forward_pallas.1} parent=0
    #allocation2 [shape = 'u8[32768]{0}', space=vmem, size = 0x8000, scoped, tag = 'input window, operand 1, single buffered']
    #allocation3 [shape = 's32[1]{0}', space=sflag, size = 0x4, scoped, tag = 'scoped memory for mlp_forward_pallas.1']
    #allocation4 [shape = 'u8[32768]{0}', space=vmem, size = 0x8000, scoped, tag = 'input window, operand 3, single buffered']
    #allocation5 [shape = 's32[1]{0}', space=sflag, size = 0x4, scoped, tag = 'scoped memory for mlp_forward_pallas.1']
    #allocation6 [shape = 'u8[32768]{0}', space=vmem, size = 0x8000, scoped, tag = 'input window, operand 5, single buffered']
    %12 = vsyncpa [#allocation3], 0
    %13 = vsyncpa [#allocation5], 0
    // Predicated region
    $region2: #{mlp_forward_pallas.1} parent=1 // pred_check
      _
    $region3: #{mlp_forward_pallas.1} parent=1 // pred_check_branch
      %15 = sbr.rel (0) target = $region5
    $region4: #{mlp_forward_pallas.1} parent=1 // pred_region
      _
    $region5: #{mlp_forward_pallas.1} parent=1 // pred_fallthru
      _
    // Predicated region
    $region6: #{mlp_forward_pallas.1} parent=1 // pred_check
      _
    $region7: #{mlp_forward_pallas.1} parent=1 // pred_check_branch
      %17 = sbr.rel (0) target = $region9
    $region8: #{mlp_forward_pallas.1} parent=1 // pred_region
      %s19 = ssub.s32 1024, 1024
      %20 = vsyncadd [#allocation3], %s19
      %s21 = sshll.u32 [#allocation2], 4
      %s22 = int_to_ptr.vmem [resolvable:$true] %s21
      %27 = dma.hbm_to_vmem [thread:$0]  %s1, 1024, %s22, [#allocation3], 64, 64, 4
    $region9: #{mlp_forward_pallas.1} parent=1 // pred_fallthru
      _
    // Predicated region
    $region10: #{mlp_forward_pallas.1} parent=1 // pred_check
      _
    $region11: #{mlp_forward_pallas.1} parent=1 // pred_check_branch
      %29 = sbr.rel (0) target = $region13
    $region12: #{mlp_forward_pallas.1} parent=1 // pred_region
      _
    $region13: #{mlp_forward_pallas.1} parent=1 // pred_fallthru
      _
    // Predicated region
    $region14: #{mlp_forward_pallas.1} parent=1 // pred_check
      _
    $region15: #{mlp_forward_pallas.1} parent=1 // pred_check_branch
      %31 = sbr.rel (0) target = $region17
    $region16: #{mlp_forward_pallas.1} parent=1 // pred_region
      %s33 = ssub.s32 1024, 1024
      %34 = vsyncadd [#allocation5], %s33
      %s35 = sshll.u32 [#allocation4], 4
      %s36 = int_to_ptr.vmem [resolvable:$true] %s35
      %41 = dma.hbm_to_vmem [thread:$0]  %s3, 1024, %s36, [#allocation5], 64, 64, 4
    $region17: #{mlp_forward_pallas.1} parent=1 // pred_fallthru
      _
    // Predicated region
    $region18: #{mlp_forward_pallas.1} parent=1 // pred_check
      _
    $region19: #{mlp_forward_pallas.1} parent=1 // pred_check_branch
      %43 = sbr.rel (0) target = $region21
    $region20: #{mlp_forward_pallas.1} parent=1 // pred_region
      _
    $region21: #{mlp_forward_pallas.1} parent=1 // pred_fallthru
      _
    // Predicated region
    $region22: #{mlp_forward_pallas.1} parent=1 // pred_check
      _
    $region23: #{mlp_forward_pallas.1} parent=1 // pred_check_branch
      %45 = sbr.rel (0) target = $region25
    $region24: #{mlp_forward_pallas.1} parent=1 // pred_region
      %s47 = ssub.s32 1024, 1024
      %48 = vsyncadd [#allocation5], %s47
      %s49 = sshll.u32 [#allocation6], 4
      %s50 = int_to_ptr.vmem [resolvable:$true] %s49
      %55 = dma.hbm_to_vmem [thread:$0]  %s5, 1024, %s50, [#allocation5], 64, 64, 4
    $region25: #{mlp_forward_pallas.1} parent=1 // pred_fallthru
      _
    // Predicated region
    $region26: #{mlp_forward_pallas.1} parent=1 // pred_check
      _
    $region27: #{mlp_forward_pallas.1} parent=1 // pred_check_branch
      %57 = sbr.rel (0) target = $region29
    $region28: #{mlp_forward_pallas.1} parent=1 // pred_region
      _
    $region29: #{mlp_forward_pallas.1} parent=1 // pred_fallthru
      _
    // Predicated region
    $region30: #{mlp_forward_pallas.1} parent=1 // pred_check
      _
    $region31: #{mlp_forward_pallas.1} parent=1 // pred_check_branch
      %59 = sbr.rel (0) target = $region33
    $region32: #{mlp_forward_pallas.1} parent=1 // pred_region
      %60 = dma.done [#allocation3], 1024
    $region33: #{mlp_forward_pallas.1} parent=1 // pred_fallthru
      _
    // Predicated region
    $region34: #{mlp_forward_pallas.1} parent=1 // pred_check
      _
    $region35: #{mlp_forward_pallas.1} parent=1 // pred_check_branch
      %62 = sbr.rel (0) target = $region37
    $region36: #{mlp_forward_pallas.1} parent=1 // pred_region
      %63 = dma.done [#allocation5], 1024
    $region37: #{mlp_forward_pallas.1} parent=1 // pred_fallthru
      _
    // Predicated region
    $region38: #{mlp_forward_pallas.1} parent=1 // pred_check
      _
    $region39: #{mlp_forward_pallas.1} parent=1 // pred_check_branch
      %65 = sbr.rel (0) target = $region41
    $region40: #{mlp_forward_pallas.1} parent=1 // pred_region
      %66 = dma.done [#allocation5], 1024
    $region41: #{mlp_forward_pallas.1} parent=1 // pred_fallthru
      _
    %v68 = vld [vmem:[%s0] sm:$0xff]
    %v69 = vld [vmem:[%s0 + $0x8] sm:$0xff]
    %v70 = vpack.c.bf16 %v69, %v68
    %v71 = vld [vmem:[#allocation2] sm:$0xf]
    %v72 = vld [vmem:[#allocation2 + $0x4] sm:$0xf]
    %v73 = vld [vmem:[#allocation2 + $0x8] sm:$0xf]
    %v74 = vld [vmem:[#allocation2 + $0xc] sm:$0xf]
    %v75 = vld [vmem:[#allocation2 + $0x10] sm:$0xf]
    %v76 = vld [vmem:[#allocation2 + $0x14] sm:$0xf]
    %v77 = vld [vmem:[#allocation2 + $0x18] sm:$0xf]
    %v78 = vld [vmem:[#allocation2 + $0x1c] sm:$0xf]
    %v79 = vld [vmem:[#allocation2 + $0x20] sm:$0xf]
    %v80 = vld [vmem:[#allocation2 + $0x24] sm:$0xf]
    %v81 = vld [vmem:[#allocation2 + $0x28] sm:$0xf]
    %v82 = vld [vmem:[#allocation2 + $0x2c] sm:$0xf]
    %v83 = vld [vmem:[#allocation2 + $0x30] sm:$0xf]
    %v84 = vld [vmem:[#allocation2 + $0x34] sm:$0xf]
    %v85 = vld [vmem:[#allocation2 + $0x38] sm:$0xf]
    %v86 = vld [vmem:[#allocation2 + $0x3c] sm:$0xf]
    %v87 = vld [vmem:[%s2] sm:$0x1]
    %v89 = vlaneseq
    %v90 = vshrl.u32 %v89, 7
    %v91 = vsub.s32 0, %v90
    %v92 = vrot.slane %v87, %v91
    %v110 = vunpack.c.l.b16 %v71
    %v111 = vunpack.c.l.b16 %v72
    %v112 = vunpack.c.l.b16 %v73
    %v113 = vunpack.c.l.b16 %v74
    %v114 = vunpack.c.l.b16 %v75
    %v115 = vunpack.c.l.b16 %v76
    %v116 = vunpack.c.l.b16 %v77
    %v117 = vunpack.c.l.b16 %v78
    %v118 = vunpack.c.l.b16 %v79
    %v119 = vunpack.c.l.b16 %v80
    %v120 = vunpack.c.l.b16 %v81
    %v121 = vunpack.c.l.b16 %v82
    %v122 = vunpack.c.l.b16 %v83
    %v123 = vunpack.c.l.b16 %v84
    %v124 = vunpack.c.l.b16 %v85
    %v125 = vunpack.c.l.b16 %v86
    %v126 = vpack.c.b16 %v111, %v110
    %v127 = vpack.c.b16 %v113, %v112
    %v128 = vpack.c.b16 %v115, %v114
    %v129 = vpack.c.b16 %v117, %v116
    %v130 = vpack.c.b16 %v119, %v118
    %v131 = vpack.c.b16 %v121, %v120
    %v132 = vpack.c.b16 %v123, %v122
    %v133 = vpack.c.b16 %v125, %v124
    %142 = vmatprep.subr.bf16.mxu0 0
    %143 = vmatpush1.bf16.msra.mxu0 %v126
    %144 = vmatprep.subr.bf16.mxu0 0
    %145 = vmatpush1.bf16.msra.mxu0 %v127
    %146 = vmatprep.subr.bf16.mxu0 0
    %147 = vmatpush1.bf16.msra.mxu0 %v128
    %148 = vmatprep.subr.bf16.mxu0 0
    %149 = vmatpush1.bf16.msra.mxu0 %v129
    %150 = vmatprep.subr.bf16.mxu0 0
    %151 = vmatpush1.bf16.msra.mxu0 %v130
    %152 = vmatprep.subr.bf16.mxu0 0
    %153 = vmatpush1.bf16.msra.mxu0 %v131
    %154 = vmatprep.subr.bf16.mxu0 0
    %155 = vmatpush1.bf16.msra.mxu0 %v132
    %156 = vmatprep.subr.bf16.mxu0 0
    %157 = vmatpush1.bf16.msra.mxu0 %v133
    %158 = vmatprep.subr.bf16.mxu0 0
    %159 = vmatpush1.bf16.msra.mxu0 0
    %160 = vmatprep.subr.bf16.mxu0 0
    %161 = vmatpush1.bf16.msra.mxu0 0
    %162 = vmatprep.subr.bf16.mxu0 0
    %163 = vmatpush1.bf16.msra.mxu0 0
    %164 = vmatprep.subr.bf16.mxu0 0
    %165 = vmatpush1.bf16.msra.mxu0 0
    %166 = vmatprep.subr.bf16.mxu0 0
    %167 = vmatpush1.bf16.msra.mxu0 0
    %168 = vmatprep.subr.bf16.mxu0 0
    %169 = vmatpush1.bf16.msra.mxu0 0
    %170 = vmatprep.subr.bf16.mxu0 0
    %171 = vmatpush1.bf16.msra.mxu0 0
    %172 = vmatprep.subr.bf16.mxu0 0
    %173 = vmatpush1.bf16.msra.mxu0 0
    %174 = vmatprep.mubr.bf16.mxu0 0
    %175 = vmatmul.mubr.bf16.gmra.mrb[0].mxu0 %v70
    %v176 = vpop.f32.mrb[0].mxu0
    %v177 = vadd.f32 %v92, %v176
    %v178 = vpop.f32.mrb[0].mxu0
    %v179 = vpop.f32.mrb[0].mxu0
    %v180 = vadd.f32 %v92, %v179
    %v181 = vpop.f32.mrb[0].mxu0
    %182 = vdwg.mxu0
    %v183 = vmax.f32 %v177, 0.0
    %v184 = vmax.f32 %v180, 0.0
    %v185 = vpack.c.bf16 %v184, %v183
    %v186 = vld [vmem:[#allocation4] sm:$0xf]
    %v187 = vld [vmem:[#allocation4 + $0x4] sm:$0xf]
    %v188 = vld [vmem:[#allocation4 + $0x8] sm:$0xf]
    %v189 = vld [vmem:[#allocation4 + $0xc] sm:$0xf]
    %v190 = vld [vmem:[#allocation4 + $0x10] sm:$0xf]
    %v191 = vld [vmem:[#allocation4 + $0x14] sm:$0xf]
    %v192 = vld [vmem:[#allocation4 + $0x18] sm:$0xf]
    %v193 = vld [vmem:[#allocation4 + $0x1c] sm:$0xf]
    %v194 = vld [vmem:[#allocation4 + $0x20] sm:$0xf]
    %v195 = vld [vmem:[#allocation4 + $0x24] sm:$0xf]
    %v196 = vld [vmem:[#allocation4 + $0x28] sm:$0xf]
    %v197 = vld [vmem:[#allocation4 + $0x2c] sm:$0xf]
    %v198 = vld [vmem:[#allocation4 + $0x30] sm:$0xf]
    %v199 = vld [vmem:[#allocation4 + $0x34] sm:$0xf]
    %v200 = vld [vmem:[#allocation4 + $0x38] sm:$0xf]
    %v201 = vld [vmem:[#allocation4 + $0x3c] sm:$0xf]
    %v202 = vld [vmem:[%s4] sm:$0x1]
    %v204 = vlaneseq
    %v205 = vshrl.u32 %v204, 7
    %v206 = vsub.s32 0, %v205
    %v207 = vrot.slane %v202, %v206
    %v225 = vunpack.c.l.b16 %v186
    %v226 = vunpack.c.l.b16 %v187
    %v227 = vunpack.c.l.b16 %v188
    %v228 = vunpack.c.l.b16 %v189
    %v229 = vunpack.c.l.b16 %v190
    %v230 = vunpack.c.l.b16 %v191
    %v231 = vunpack.c.l.b16 %v192
    %v232 = vunpack.c.l.b16 %v193
    %v233 = vunpack.c.l.b16 %v194
    %v234 = vunpack.c.l.b16 %v195
    %v235 = vunpack.c.l.b16 %v196
    %v236 = vunpack.c.l.b16 %v197
    %v237 = vunpack.c.l.b16 %v198
    %v238 = vunpack.c.l.b16 %v199
    %v239 = vunpack.c.l.b16 %v200
    %v240 = vunpack.c.l.b16 %v201
    %v241 = vpack.c.b16 %v226, %v225
    %v242 = vpack.c.b16 %v228, %v227
    %v243 = vpack.c.b16 %v230, %v229
    %v244 = vpack.c.b16 %v232, %v231
    %v245 = vpack.c.b16 %v234, %v233
    %v246 = vpack.c.b16 %v236, %v235
    %v247 = vpack.c.b16 %v238, %v237
    %v248 = vpack.c.b16 %v240, %v239
    %257 = vmatprep.subr.bf16.mxu0 0
    %258 = vmatpush1.bf16.msra.mxu0 %v241
    %259 = vmatprep.subr.bf16.mxu0 0
    %260 = vmatpush1.bf16.msra.mxu0 %v242
    %261 = vmatprep.subr.bf16.mxu0 0
    %262 = vmatpush1.bf16.msra.mxu0 %v243
    %263 = vmatprep.subr.bf16.mxu0 0
    %264 = vmatpush1.bf16.msra.mxu0 %v244
    %265 = vmatprep.subr.bf16.mxu0 0
    %266 = vmatpush1.bf16.msra.mxu0 %v245
    %267 = vmatprep.subr.bf16.mxu0 0
    %268 = vmatpush1.bf16.msra.mxu0 %v246
    %269 = vmatprep.subr.bf16.mxu0 0
    %270 = vmatpush1.bf16.msra.mxu0 %v247
    %271 = vmatprep.subr.bf16.mxu0 0
    %272 = vmatpush1.bf16.msra.mxu0 %v248
    %273 = vmatprep.subr.bf16.mxu0 0
    %274 = vmatpush1.bf16.msra.mxu0 0
    %275 = vmatprep.subr.bf16.mxu0 0
    %276 = vmatpush1.bf16.msra.mxu0 0
    %277 = vmatprep.subr.bf16.mxu0 0
    %278 = vmatpush1.bf16.msra.mxu0 0
    %279 = vmatprep.subr.bf16.mxu0 0
    %280 = vmatpush1.bf16.msra.mxu0 0
    %281 = vmatprep.subr.bf16.mxu0 0
    %282 = vmatpush1.bf16.msra.mxu0 0
    %283 = vmatprep.subr.bf16.mxu0 0
    %284 = vmatpush1.bf16.msra.mxu0 0
    %285 = vmatprep.subr.bf16.mxu0 0
    %286 = vmatpush1.bf16.msra.mxu0 0
    %287 = vmatprep.subr.bf16.mxu0 0
    %288 = vmatpush1.bf16.msra.mxu0 0
    %289 = vmatprep.mubr.bf16.mxu0 0
    %290 = vmatmul.mubr.bf16.gmra.mrb[0].mxu0 %v185
    %v291 = vpop.f32.mrb[0].mxu0
    %v292 = vadd.f32 %v207, %v291
    %v293 = vpop.f32.mrb[0].mxu0
    %v294 = vpop.f32.mrb[0].mxu0
    %v295 = vadd.f32 %v207, %v294
    %v296 = vpop.f32.mrb[0].mxu0
    %297 = vdwg.mxu0
    %v298 = vmax.f32 %v292, 0.0
    %v299 = vmax.f32 %v295, 0.0
    %v300 = vpack.c.bf16 %v299, %v298
    %v301 = vld [vmem:[#allocation6] sm:$0xf]
    %v302 = vld [vmem:[#allocation6 + $0x4] sm:$0xf]
    %v303 = vld [vmem:[#allocation6 + $0x8] sm:$0xf]
    %v304 = vld [vmem:[#allocation6 + $0xc] sm:$0xf]
    %v305 = vld [vmem:[#allocation6 + $0x10] sm:$0xf]
    %v306 = vld [vmem:[#allocation6 + $0x14] sm:$0xf]
    %v307 = vld [vmem:[#allocation6 + $0x18] sm:$0xf]
    %v308 = vld [vmem:[#allocation6 + $0x1c] sm:$0xf]
    %v309 = vld [vmem:[#allocation6 + $0x20] sm:$0xf]
    %v310 = vld [vmem:[#allocation6 + $0x24] sm:$0xf]
    %v311 = vld [vmem:[#allocation6 + $0x28] sm:$0xf]
    %v312 = vld [vmem:[#allocation6 + $0x2c] sm:$0xf]
    %v313 = vld [vmem:[#allocation6 + $0x30] sm:$0xf]
    %v314 = vld [vmem:[#allocation6 + $0x34] sm:$0xf]
    %v315 = vld [vmem:[#allocation6 + $0x38] sm:$0xf]
    %v316 = vld [vmem:[#allocation6 + $0x3c] sm:$0xf]
    %v317 = vld [vmem:[%s6] sm:$0x1]
    %v319 = vlaneseq
    %v320 = vshrl.u32 %v319, 7
    %v321 = vsub.s32 0, %v320
    %v322 = vrot.slane %v317, %v321
    %v340 = vunpack.c.l.b16 %v301
    %v341 = vunpack.c.l.b16 %v302
    %v342 = vunpack.c.l.b16 %v303
    %v343 = vunpack.c.l.b16 %v304
    %v344 = vunpack.c.l.b16 %v305
    %v345 = vunpack.c.l.b16 %v306
    %v346 = vunpack.c.l.b16 %v307
    %v347 = vunpack.c.l.b16 %v308
    %v348 = vunpack.c.l.b16 %v309
    %v349 = vunpack.c.l.b16 %v310
    %v350 = vunpack.c.l.b16 %v311
    %v351 = vunpack.c.l.b16 %v312
    %v352 = vunpack.c.l.b16 %v313
    %v353 = vunpack.c.l.b16 %v314
    %v354 = vunpack.c.l.b16 %v315
    %v355 = vunpack.c.l.b16 %v316
    %v356 = vpack.c.b16 %v341, %v340
    %v357 = vpack.c.b16 %v343, %v342
    %v358 = vpack.c.b16 %v345, %v344
    %v359 = vpack.c.b16 %v347, %v346
    %v360 = vpack.c.b16 %v349, %v348
    %v361 = vpack.c.b16 %v351, %v350
    %v362 = vpack.c.b16 %v353, %v352
    %v363 = vpack.c.b16 %v355, %v354
    %372 = vmatprep.subr.bf16.mxu0 0
    %373 = vmatpush1.bf16.msra.mxu0 %v356
    %374 = vmatprep.subr.bf16.mxu0 0
    %375 = vmatpush1.bf16.msra.mxu0 %v357
    %376 = vmatprep.subr.bf16.mxu0 0
    %377 = vmatpush1.bf16.msra.mxu0 %v358
    %378 = vmatprep.subr.bf16.mxu0 0
    %379 = vmatpush1.bf16.msra.mxu0 %v359
    %380 = vmatprep.subr.bf16.mxu0 0
    %381 = vmatpush1.bf16.msra.mxu0 %v360
    %382 = vmatprep.subr.bf16.mxu0 0
    %383 = vmatpush1.bf16.msra.mxu0 %v361
    %384 = vmatprep.subr.bf16.mxu0 0
    %385 = vmatpush1.bf16.msra.mxu0 %v362
    %386 = vmatprep.subr.bf16.mxu0 0
    %387 = vmatpush1.bf16.msra.mxu0 %v363
    %388 = vmatprep.subr.bf16.mxu0 0
    %389 = vmatpush1.bf16.msra.mxu0 0
    %390 = vmatprep.subr.bf16.mxu0 0
    %391 = vmatpush1.bf16.msra.mxu0 0
    %392 = vmatprep.subr.bf16.mxu0 0
    %393 = vmatpush1.bf16.msra.mxu0 0
    %394 = vmatprep.subr.bf16.mxu0 0
    %395 = vmatpush1.bf16.msra.mxu0 0
    %396 = vmatprep.subr.bf16.mxu0 0
    %397 = vmatpush1.bf16.msra.mxu0 0
    %398 = vmatprep.subr.bf16.mxu0 0
    %399 = vmatpush1.bf16.msra.mxu0 0
    %400 = vmatprep.subr.bf16.mxu0 0
    %401 = vmatpush1.bf16.msra.mxu0 0
    %402 = vmatprep.subr.bf16.mxu0 0
    %403 = vmatpush1.bf16.msra.mxu0 0
    %404 = vmatprep.mubr.bf16.mxu0 0
    %405 = vmatmul.mubr.bf16.gmra.mrb[0].mxu0 %v300
    %v406 = vpop.f32.mrb[0].mxu0
    %v407 = vadd.f32 %v322, %v406
    %v408 = vpop.f32.mrb[0].mxu0
    %v409 = vpop.f32.mrb[0].mxu0
    %v410 = vadd.f32 %v322, %v409
    %v411 = vpop.f32.mrb[0].mxu0
    %412 = vdwg.mxu0
    %413 = vst [vmem:[%s7] sm:$0xff] %v407
    %414 = vst [vmem:[%s7 + $0x8] sm:$0xff] %v410
    // Predicated region
    $region42: #{mlp_forward_pallas.1} parent=1 // pred_check
      _
    $region43: #{mlp_forward_pallas.1} parent=1 // pred_check_branch
      %416 = sbr.rel (0) target = $region45
    $region44: #{mlp_forward_pallas.1} parent=1 // pred_region
      _
    $region45: #{mlp_forward_pallas.1} parent=1 // pred_fallthru
      _
    // Predicated region
    $region46: #{mlp_forward_pallas.1} parent=1 // pred_check
      _
    $region47: #{mlp_forward_pallas.1} parent=1 // pred_check_branch
      %418 = sbr.rel (0) target = $region49
    $region48: #{mlp_forward_pallas.1} parent=1 // pred_region
      _
    $region49: #{mlp_forward_pallas.1} parent=1 // pred_fallthru
      _
    %419 = vsyncpa [#allocation3], 1
    %420 = vsyncpa [#allocation5], 1

</llo_original>
